<compile_context>
chip_gen: v7x
topology: tpu7x:2x2x1
jax: 0.10.0
libtpu: 0.0.40
codegen_flags: <defaults>
</compile_context>

<pallas_src>
import functools
import math

import jax
import jax.numpy as jnp
from jax import lax
from jax.experimental import pallas as pl
from jax.experimental.pallas import tpu as pltpu


# ---------------------------------------------------------------------------
# Tiling / VMEM helpers
# ---------------------------------------------------------------------------

def _sublane_pack(dtype):
    bits = jnp.dtype(dtype).itemsize * 8
    return max(8, 256 // bits)          # 8 (32-bit), 16 (16-bit), 32 (8-bit)


def _choose_tile(dim, target, pack):
    """Return (tile, padded_dim): tile divides padded_dim >= dim and is either
    the full dim (always a legal block) or a multiple of the sublane packing."""
    if dim <= target:
        return dim, dim                  # full-dim block: legal regardless of pack
    for t in range(min(target, dim), pack - 1, -1):
        if dim % t == 0 and t % pack == 0:
            return t, dim
    tile = max(pack, (target // pack) * pack)
    padded = ((dim + tile - 1) // tile) * tile
    return tile, padded                  # padded case -> in-kernel KV mask / Q trim


def _pad_lane(n):
    return ((n + 127) // 128) * 128


def _vmem_estimate(tq, tk, lane_q, lane_k, lane_v, lane_o, n_scratch_heads,
                   head_d, itemsize):
    # Double-buffered pipeline blocks (q, k, v, o) + persistent scratch.
    blocks = 2 * itemsize * (tq * _pad_lane(lane_q) + tk * _pad_lane(lane_k)
                             + tk * _pad_lane(lane_v) + tq * _pad_lane(lane_o))
    scratch = (n_scratch_heads * tq * (2 * _pad_lane(1) + _pad_lane(head_d)) * 4
               + itemsize * tq * _pad_lane(lane_q))           # m, l, acc + scaled-Q
    return blocks + scratch


def _vmem_capacity():
    try:
        info = pltpu.get_tpu_info()
        for name in ("vmem_capacity_bytes", "vmem_bytes", "vmem_size_bytes"):
            v = getattr(info, name, None)
            if v:
                return int(v)
    except Exception:
        pass
    return 64 << 20                       # conservative fallback (v7x-sized)


# ---------------------------------------------------------------------------
# Kernels
# ---------------------------------------------------------------------------

def _flash_kernel_folded(q_ref, k_ref, v_ref, o_ref,
                         qs_scr, m_scr, l_scr, acc_scr, *,
                         scale, num_heads, head_e, head_d,
                         kv_tile, s_valid, mask_kv):
    # q_ref: (1, tq, H*E)  k_ref: (1, tk, H*E)  v_ref: (1, tk, H*D)
    # o_ref: (1, tq, H*D)
    # qs_scr: (tq, H*E) scaled Q; m/l: (H, tq, 1) f32; acc: (H, tq, D) f32
    kv = pl.program_id(2)

    @pl.when(kv == 0)
    def _init():
        m_scr[...] = jnp.full(m_scr.shape, -jnp.inf, dtype=m_scr.dtype)
        l_scr[...] = jnp.zeros(l_scr.shape, dtype=l_scr.dtype)
        acc_scr[...] = jnp.zeros(acc_scr.shape, dtype=acc_scr.dtype)
        # Scale Q once per (batch, q-block); reused across the whole KV sweep.
        qs_scr[...] = (q_ref[0].astype(jnp.float32) * scale).astype(qs_scr.dtype)

    q_all = qs_scr[...]                   # (tq, H*E), already scaled
    k_all = k_ref[0]                      # (tk, H*E)
    v_all = v_ref[0]                      # (tk, H*D)

    if mask_kv:                           # static: emitted only when S was padded
        col = kv * kv_tile + lax.broadcasted_iota(jnp.int32, (1, kv_tile), 1)
        valid = col < s_valid             # (1, tk)

    for h in range(num_heads):            # static unroll over lane-folded heads
        q_h = q_all[:, h * head_e:(h + 1) * head_e]   # (tq, E)
        k_h = k_all[:, h * head_e:(h + 1) * head_e]   # (tk, E)
        v_h = v_all[:, h * head_d:(h + 1) * head_d]   # (tk, D)

        # s[l, s'] = sum_e q_h[l, e] * k_h[s', e]  (no explicit k.T)
        s = lax.dot_general(q_h, k_h, (((1,), (1,)), ((), ())),
                            preferred_element_type=jnp.float32)      # (tq, tk)
        if mask_kv:
            s = jnp.where(valid, s, -jnp.inf)

        m_prev = m_scr[h]                                            # (tq, 1)
        m_new = jnp.maximum(m_prev, jnp.max(s, axis=-1, keepdims=True))
        alpha = jnp.exp(m_prev - m_new)
        p = jnp.exp(s - m_new)                                       # (tq, tk)

        l_scr[h] = alpha * l_scr[h] + jnp.sum(p, axis=-1, keepdims=True)
        acc_scr[h] = alpha * acc_scr[h] + jnp.dot(
            p.astype(v_h.dtype), v_h, preferred_element_type=jnp.float32)
        m_scr[h] = m_new

    @pl.when(kv == pl.num_programs(2) - 1)
    def _finalize():
        outs = []
        for h in range(num_heads):
            inv_l = pl.reciprocal(l_scr[h], approx=True)   # EUP, off VALU path
            # Cast each head before concatenating -> half the vreg footprint.
            outs.append((acc_scr[h] * inv_l).astype(o_ref.dtype))
        o_ref[0] = jnp.concatenate(outs, axis=-1)          # single lane-dense store


def _flash_kernel_headgrid(q_ref, k_ref, v_ref, o_ref,
                           qs_scr, m_scr, l_scr, acc_scr, *,
                           scale, kv_tile, s_valid, mask_kv):
    # Per-head grid axis; q_ref: (1, tq, E), k_ref: (1, tk, E), v_ref: (1, tk, D)
    kv = pl.program_id(3)

    @pl.when(kv == 0)
    def _init():
        m_scr[...] = jnp.full(m_scr.shape, -jnp.inf, dtype=m_scr.dtype)
        l_scr[...] = jnp.zeros(l_scr.shape, dtype=l_scr.dtype)
        acc_scr[...] = jnp.zeros(acc_scr.shape, dtype=acc_scr.dtype)
        qs_scr[...] = (q_ref[0].astype(jnp.float32) * scale).astype(qs_scr.dtype)

    q = qs_scr[...]
    k = k_ref[0]
    v = v_ref[0]

    s = lax.dot_general(q, k, (((1,), (1,)), ((), ())),
                        preferred_element_type=jnp.float32)          # (tq, tk)
    if mask_kv:
        col = kv * kv_tile + lax.broadcasted_iota(jnp.int32, (1, kv_tile), 1)
        s = jnp.where(col < s_valid, s, -jnp.inf)

    m_prev = m_scr[...]
    m_new = jnp.maximum(m_prev, jnp.max(s, axis=-1, keepdims=True))
    alpha = jnp.exp(m_prev - m_new)
    p = jnp.exp(s - m_new)

    l_scr[...] = alpha * l_scr[...] + jnp.sum(p, axis=-1, keepdims=True)
    acc_scr[...] = alpha * acc_scr[...] + jnp.dot(
        p.astype(v.dtype), v, preferred_element_type=jnp.float32)
    m_scr[...] = m_new

    @pl.when(kv == pl.num_programs(3) - 1)
    def _finalize():
        inv_l = pl.reciprocal(l_scr[...], approx=True)
        o_ref[0] = (acc_scr[...] * inv_l).astype(o_ref.dtype)


# ---------------------------------------------------------------------------
# Wrapper
# ---------------------------------------------------------------------------

def scale_dot_product_attention(queries, keys, values, scale=None, *,
                                q_tile_target=None, kv_tile_target=None,
                                vmem_limit_bytes=None, matmul_dtype=None):
    """queries: (B, L, H, E), keys: (B, S, H, E), values: (B, S, H, D).
    Returns (V, None) with V: (B, L, H, D), matching the PyTorch module."""
    B, L, H, E = queries.shape
    _, S, _, D = values.shape
    if scale is None:
        scale = 1.0 / math.sqrt(E)
    scale = float(scale)

    out_dtype = queries.dtype
    if matmul_dtype is not None:
        # Optional MXU-native precision for QK^T (v6e/v7x); PV already casts P
        # to v.dtype in-kernel.  Default (None) keeps input precision.
        queries = queries.astype(matmul_dtype)
        keys = keys.astype(matmul_dtype)

    # ---- per-generation tiling / scoped-VMEM defaults -----------------------
    vmem_cap = _vmem_capacity()
    if vmem_cap >= (96 << 20):            # v5e / v6e: 128 MiB physical VMEM
        dq, dk = 512, 512
        dvmem = min(100 << 20, vmem_cap - (16 << 20))
    else:                                 # v7x: 64 MiB per TensorCore (or unknown)
        dq, dk = 256, 512
        dvmem = max(16 << 20, vmem_cap - (8 << 20))
    q_tile_target = dq if q_tile_target is None else q_tile_target
    kv_tile_target = dk if kv_tile_target is None else kv_tile_target
    vmem_limit_bytes = dvmem if vmem_limit_bytes is None else vmem_limit_bytes

    itemsize = max(jnp.dtype(queries.dtype).itemsize,
                   jnp.dtype(values.dtype).itemsize)
    pack = max(_sublane_pack(queries.dtype), _sublane_pack(values.dtype))

    head_grid = (E % 128 == 0) and (D % 128 == 0)

    def estimate(tq_, tk_):
        if head_grid:
            return _vmem_estimate(tq_, tk_, E, E, D, D, 1, D, itemsize)
        return _vmem_estimate(tq_, tk_, H * E, H * E, H * D, H * D, H, D, itemsize)

    qt, kt = q_tile_target, kv_tile_target
    tq, Lp = _choose_tile(L, qt, pack)
    tk, Sp = _choose_tile(S, kt, pack)
    budget = vmem_limit_bytes - (4 << 20)
    while estimate(tq, tk) > budget and (qt > pack or kt > pack):
        if kt >= qt and kt > pack:
            kt = max(pack, kt // 2)
        else:
            qt = max(pack, qt // 2)
        tq, Lp = _choose_tile(L, qt, pack)
        tk, Sp = _choose_tile(S, kt, pack)

    # ---- free trailing-dim reshapes, pad (no HBM transposes) ----------------
    q2 = queries.reshape(B, L, H * E)
    k2 = keys.reshape(B, S, H * E)
    v2 = values.reshape(B, S, H * D)
    if Lp != L:
        q2 = jnp.pad(q2, ((0, 0), (0, Lp - L), (0, 0)))
    if Sp != S:
        k2 = jnp.pad(k2, ((0, 0), (0, Sp - S), (0, 0)))
        v2 = jnp.pad(v2, ((0, 0), (0, Sp - S), (0, 0)))
    mask_kv = (Sp != S)
    n_q, n_kv = Lp // tq, Sp // tk

    # ---- scheduler hint ------------------------------------------------------
    flops = 2 * B * H * L * S * (E + D)
    transcendentals = B * H * L * S
    bytes_accessed = int(q2.size * q2.dtype.itemsize
                         + n_q * (k2.size * k2.dtype.itemsize
                                  + v2.size * v2.dtype.itemsize)
                         + B * Lp * H * D * jnp.dtype(out_dtype).itemsize)
    cost = pl.CostEstimate(flops=int(flops), transcendentals=int(transcendentals),
                           bytes_accessed=bytes_accessed)

    if not head_grid:
        # Lane-folded heads (small / non-128-aligned E, D).
        kernel = functools.partial(
            _flash_kernel_folded, scale=scale, num_heads=H, head_e=E, head_d=D,
            kv_tile=tk, s_valid=S, mask_kv=mask_kv)
        out2 = pl.pallas_call(
            kernel,
            out_shape=jax.ShapeDtypeStruct((B, Lp, H * D), out_dtype),
            grid_spec=pltpu.PrefetchScalarGridSpec(
                num_scalar_prefetch=0,
                grid=(B, n_q, n_kv),                     # KV axis last (reduction)
                in_specs=[
                    pl.BlockSpec((1, tq, H * E), lambda b, lq, kv: (b, lq, 0)),
                    pl.BlockSpec((1, tk, H * E), lambda b, lq, kv: (b, kv, 0)),
                    pl.BlockSpec((1, tk, H * D), lambda b, lq, kv: (b, kv, 0)),
                ],
                out_specs=pl.BlockSpec((1, tq, H * D), lambda b, lq, kv: (b, lq, 0)),
                scratch_shapes=[
                    pltpu.VMEM((tq, H * E), q2.dtype),    # scaled Q
                    pltpu.VMEM((H, tq, 1), jnp.float32),  # running max m
                    pltpu.VMEM((H, tq, 1), jnp.float32),  # running denom l
                    pltpu.VMEM((H, tq, D), jnp.float32),  # running numerator acc
                ],
            ),
            compiler_params=pltpu.CompilerParams(
                dimension_semantics=("parallel", "parallel", "arbitrary"),
                vmem_limit_bytes=vmem_limit_bytes),
            cost_estimate=cost,
        )(q2, k2, v2)
    else:
        # Head grid axis (E, D multiples of 128): per-step VMEM no longer scales
        # with H, and the extra "parallel" axis feeds the v7x megacore.
        kernel = functools.partial(
            _flash_kernel_headgrid, scale=scale, kv_tile=tk, s_valid=S,
            mask_kv=mask_kv)
        out2 = pl.pallas_call(
            kernel,
            out_shape=jax.ShapeDtypeStruct((B, Lp, H * D), out_dtype),
            grid_spec=pltpu.PrefetchScalarGridSpec(
                num_scalar_prefetch=0,
                grid=(B, H, n_q, n_kv),
                in_specs=[
                    pl.BlockSpec((1, tq, E), lambda b, h, lq, kv: (b, lq, h)),
                    pl.BlockSpec((1, tk, E), lambda b, h, lq, kv: (b, kv, h)),
                    pl.BlockSpec((1, tk, D), lambda b, h, lq, kv: (b, kv, h)),
                ],
                out_specs=pl.BlockSpec((1, tq, D), lambda b, h, lq, kv: (b, lq, h)),
                scratch_shapes=[
                    pltpu.VMEM((tq, E), q2.dtype),
                    pltpu.VMEM((tq, 1), jnp.float32),
                    pltpu.VMEM((tq, 1), jnp.float32),
                    pltpu.VMEM((tq, D), jnp.float32),
                ],
            ),
            compiler_params=pltpu.CompilerParams(
                dimension_semantics=("parallel", "parallel", "parallel",
                                     "arbitrary"),
                vmem_limit_bytes=vmem_limit_bytes),
            cost_estimate=cost,
        )(q2, k2, v2)

    V = out2[:, :L, :].reshape(B, L, H, D)
    return V, None


# ---------------------------------------------------------------------------
# Reference + tests
# ---------------------------------------------------------------------------

def _reference(queries, keys, values, scale):
    scores = jnp.einsum("blhe,bshe->bhls", queries, keys)
    A = jax.nn.softmax(scale * scores, axis=-1)
    return jnp.einsum("bhls,bshd->blhd", A, values)


def _check(key, B, L, S, H, E, D, **kwargs):
    kq, kk, kv = jax.random.split(key, 3)
    q = jax.random.normal(kq, (B, L, H, E), dtype=jnp.float32)
    k = jax.random.normal(kk, (B, S, H, E), dtype=jnp.float32)
    v = jax.random.normal(kv, (B, S, H, D), dtype=jnp.float32)

    V, attn = scale_dot_product_attention(q, k, v, **kwargs)
    V = jax.block_until_ready(V)

    ref = _reference(q, k, v, 1.0 / math.sqrt(E))
    assert V.shape == (B, L, H, D)
    assert attn is None
    # approx reciprocal + online softmax -> ~1e-3 level differences vs reference
    assert jnp.allclose(V, ref, atol=5e-3, rtol=5e-3), (
        float(jnp.max(jnp.abs(V - ref))))


if __name__ == "__main__":
    key = jax.random.PRNGKey(0)
    k1, k2, k3, k4 = jax.random.split(key, 4)

    # Small shape consistent with the module's forward (single block).
    _check(k1, B=2, L=8, S=8, H=2, E=32, D=32)
    # Multi-block online softmax (forced small tiles: n_q=2, n_kv=3).
    _check(k2, B=1, L=256, S=384, H=2, E=32, D=32,
           q_tile_target=128, kv_tile_target=128)
    # Non-divisible L/S: exercises Q padding + in-kernel KV masking.
    _check(k3, B=1, L=132, S=132, H=2, E=32, D=32,
           q_tile_target=128, kv_tile_target=128)
    # 128-aligned head dims: exercises the head-grid-axis path.
    _check(k4, B=1, L=128, S=128, H=2, E=128, D=128)

    print("KERNEL_OK")
</pallas_src>

<mosaic_0001>
module attributes {stable_mosaic.version = 11 : i64} {
  func.func @_flash_kernel_folded(%arg0: i32, %arg1: i32, %arg2: i32, %arg3: memref<1x8x64xf32, #tpu.memory_space<vmem>>, %arg4: memref<1x8x64xf32, #tpu.memory_space<vmem>>, %arg5: memref<1x8x64xf32, #tpu.memory_space<vmem>>, %arg6: memref<1x8x64xf32, #tpu.memory_space<vmem>>, %arg7: memref<8x64xf32, #tpu.memory_space<vmem>>, %arg8: memref<2x8x1xf32, #tpu.memory_space<vmem>>, %arg9: memref<2x8x1xf32, #tpu.memory_space<vmem>>, %arg10: memref<2x8x32xf32, #tpu.memory_space<vmem>>) attributes {dimension_semantics = [#tpu.dimension_semantics<parallel>, #tpu.dimension_semantics<parallel>, #tpu.dimension_semantics<arbitrary>], iteration_bounds = array<i64: 2, 1, 1>, scalar_prefetch = 0 : i64, scratch_operands = 4 : i64, tpu.core_type = #tpu.core_type<tc>, window_params = [{transform_indices = @transform_0, window_bounds = array<i64: 1, 8, 64>}, {transform_indices = @transform_1, window_bounds = array<i64: 1, 8, 64>}, {transform_indices = @transform_2, window_bounds = array<i64: 1, 8, 64>}, {transform_indices = @transform_3, window_bounds = array<i64: 1, 8, 64>}]} {
    %c0_i32 = arith.constant 0 : i32
    %0 = arith.cmpi eq, %arg2, %c0_i32 : i32
    %1 = arith.extui %0 : i1 to i32
    %c0_i32_0 = arith.constant 0 : i32
    %2 = arith.cmpi ne, %1, %c0_i32_0 : i32
    scf.if %2 {
      %cst_52 = arith.constant 0xFF800000 : f32
      %81 = vector.broadcast %cst_52 : f32 to vector<2x8x1xf32>
      %c0_53 = arith.constant 0 : index
      %c0_54 = arith.constant 0 : index
      %c0_55 = arith.constant 0 : index
      %82 = vector.load %arg8[%c0_53, %c0_54, %c0_55] : memref<2x8x1xf32, #tpu.memory_space<vmem>>, vector<2x8x1xf32>
      tpu.vector_store %arg8[%c0_53, %c0_54, %c0_55], %81 {strides = array<i32>} : memref<2x8x1xf32, #tpu.memory_space<vmem>>, vector<2x8x1xf32>,
      %cst_56 = arith.constant 0.000000e+00 : f32
      %83 = vector.broadcast %cst_56 : f32 to vector<2x8x1xf32>
      %c0_57 = arith.constant 0 : index
      %c0_58 = arith.constant 0 : index
      %c0_59 = arith.constant 0 : index
      %84 = vector.load %arg9[%c0_57, %c0_58, %c0_59] : memref<2x8x1xf32, #tpu.memory_space<vmem>>, vector<2x8x1xf32>
      tpu.vector_store %arg9[%c0_57, %c0_58, %c0_59], %83 {strides = array<i32>} : memref<2x8x1xf32, #tpu.memory_space<vmem>>, vector<2x8x1xf32>,
      %cst_60 = arith.constant 0.000000e+00 : f32
      %85 = vector.broadcast %cst_60 : f32 to vector<2x8x32xf32>
      %c0_61 = arith.constant 0 : index
      %c0_62 = arith.constant 0 : index
      %c0_63 = arith.constant 0 : index
      %86 = vector.load %arg10[%c0_61, %c0_62, %c0_63] : memref<2x8x32xf32, #tpu.memory_space<vmem>>, vector<2x8x32xf32>
      tpu.vector_store %arg10[%c0_61, %c0_62, %c0_63], %85 {strides = array<i32>} : memref<2x8x32xf32, #tpu.memory_space<vmem>>, vector<2x8x32xf32>,
      %c0_64 = arith.constant 0 : index
      %c0_65 = arith.constant 0 : index
      %c0_66 = arith.constant 0 : index
      %87 = vector.load %arg3[%c0_64, %c0_65, %c0_66] : memref<1x8x64xf32, #tpu.memory_space<vmem>>, vector<1x8x64xf32>
      %88 = vector.shape_cast %87 : vector<1x8x64xf32> to vector<8x64xf32>
      %cst_67 = arith.constant 0.176776692 : f32
      %89 = vector.broadcast %cst_67 : f32 to vector<8x64xf32>
      %90 = arith.mulf %88, %89 : vector<8x64xf32>
      %c0_68 = arith.constant 0 : index
      %c0_69 = arith.constant 0 : index
      %91 = vector.load %arg7[%c0_68, %c0_69] : memref<8x64xf32, #tpu.memory_space<vmem>>, vector<8x64xf32>
      tpu.vector_store %arg7[%c0_68, %c0_69], %90 {strides = array<i32>} : memref<8x64xf32, #tpu.memory_space<vmem>>, vector<8x64xf32>,
    } else {
    }
    %c0 = arith.constant 0 : index
    %c0_1 = arith.constant 0 : index
    %3 = vector.load %arg7[%c0, %c0_1] : memref<8x64xf32, #tpu.memory_space<vmem>>, vector<8x64xf32>
    %c0_2 = arith.constant 0 : index
    %c0_3 = arith.constant 0 : index
    %c0_4 = arith.constant 0 : index
    %4 = vector.load %arg4[%c0_2, %c0_3, %c0_4] : memref<1x8x64xf32, #tpu.memory_space<vmem>>, vector<1x8x64xf32>
    %5 = vector.shape_cast %4 : vector<1x8x64xf32> to vector<8x64xf32>
    %c0_5 = arith.constant 0 : index
    %c0_6 = arith.constant 0 : index
    %c0_7 = arith.constant 0 : index
    %6 = vector.load %arg5[%c0_5, %c0_6, %c0_7] : memref<1x8x64xf32, #tpu.memory_space<vmem>>, vector<1x8x64xf32>
    %7 = vector.shape_cast %6 : vector<1x8x64xf32> to vector<8x64xf32>
    %8 = vector.extract_strided_slice %3 {offsets = [0, 0], sizes = [8, 32], strides = [1, 1]} : vector<8x64xf32> to vector<8x32xf32>
    %9 = vector.extract_strided_slice %5 {offsets = [0, 0], sizes = [8, 32], strides = [1, 1]} : vector<8x64xf32> to vector<8x32xf32>
    %10 = vector.extract_strided_slice %7 {offsets = [0, 0], sizes = [8, 32], strides = [1, 1]} : vector<8x64xf32> to vector<8x32xf32>
    %cst = arith.constant dense<0.000000e+00> : vector<8x8xf32>
    %11 = tpu.matmul %8, %9, %cst {dimension_numbers = #tpu.dot_dimension_numbers<[1], [1], [0], [0], [0, 0, 1, 0], [], []>} : vector<8x32xf32>, vector<8x32xf32>, vector<8x8xf32> -> vector<8x8xf32>
    %c0_8 = arith.constant 0 : index
    %c0_9 = arith.constant 0 : index
    %c0_10 = arith.constant 0 : index
    %12 = vector.load %arg8[%c0_8, %c0_9, %c0_10] : memref<2x8x1xf32, #tpu.memory_space<vmem>>, vector<1x8x1xf32>
    %13 = vector.shape_cast %12 : vector<1x8x1xf32> to vector<8x1xf32>
    %cst_11 = arith.constant dense<0xFF800000> : vector<8xf32>
    %14 = vector.multi_reduction <maximumf>, %11, %cst_11 [1] : vector<8x8xf32> to vector<8xf32>
    %15 = vector.shape_cast %14 : vector<8xf32> to vector<8x1xf32>
    %16 = arith.maximumf %13, %15 : vector<8x1xf32>
    %17 = arith.subf %13, %16 : vector<8x1xf32>
    %18 = math.exp %17 : vector<8x1xf32>
    %19 = vector.broadcast %16 : vector<8x1xf32> to vector<8x8xf32>
    %20 = arith.subf %11, %19 : vector<8x8xf32>
    %21 = math.exp %20 : vector<8x8xf32>
    %c0_12 = arith.constant 0 : index
    %c0_13 = arith.constant 0 : index
    %c0_14 = arith.constant 0 : index
    %22 = vector.load %arg9[%c0_12, %c0_13, %c0_14] : memref<2x8x1xf32, #tpu.memory_space<vmem>>, vector<1x8x1xf32>
    %23 = vector.shape_cast %22 : vector<1x8x1xf32> to vector<8x1xf32>
    %24 = arith.mulf %18, %23 : vector<8x1xf32>
    %cst_15 = arith.constant dense<0.000000e+00> : vector<8xf32>
    %25 = vector.multi_reduction <add>, %21, %cst_15 [1] : vector<8x8xf32> to vector<8xf32>
    %26 = vector.shape_cast %25 : vector<8xf32> to vector<8x1xf32>
    %27 = arith.addf %24, %26 : vector<8x1xf32>
    %c0_16 = arith.constant 0 : index
    %c0_17 = arith.constant 0 : index
    %c0_18 = arith.constant 0 : index
    %28 = vector.load %arg9[%c0_16, %c0_17, %c0_18] : memref<2x8x1xf32, #tpu.memory_space<vmem>>, vector<1x8x1xf32>
    %29 = vector.shape_cast %28 : vector<1x8x1xf32> to vector<8x1xf32>
    %30 = vector.shape_cast %27 : vector<8x1xf32> to vector<1x8x1xf32>
    tpu.vector_store %arg9[%c0_16, %c0_17, %c0_18], %30 {strides = array<i32>} : memref<2x8x1xf32, #tpu.memory_space<vmem>>, vector<1x8x1xf32>,
    %c0_19 = arith.constant 0 : index
    %c0_20 = arith.constant 0 : index
    %c0_21 = arith.constant 0 : index
    %31 = vector.load %arg10[%c0_19, %c0_20, %c0_21] : memref<2x8x32xf32, #tpu.memory_space<vmem>>, vector<1x8x32xf32>
    %32 = vector.shape_cast %31 : vector<1x8x32xf32> to vector<8x32xf32>
    %33 = vector.broadcast %18 : vector<8x1xf32> to vector<8x32xf32>
    %34 = arith.mulf %33, %32 : vector<8x32xf32>
    %cst_22 = arith.constant dense<0.000000e+00> : vector<8x32xf32>
    %35 = tpu.matmul %21, %10, %cst_22 {dimension_numbers = #tpu.dot_dimension_numbers<[1], [0], [0], [1], [0, 0, 1, 1], [], []>} : vector<8x8xf32>, vector<8x32xf32>, vector<8x32xf32> -> vector<8x32xf32>
    %36 = arith.addf %34, %35 : vector<8x32xf32>
    %c0_23 = arith.constant 0 : index
    %c0_24 = arith.constant 0 : index
    %c0_25 = arith.constant 0 : index
    %37 = vector.load %arg10[%c0_23, %c0_24, %c0_25] : memref<2x8x32xf32, #tpu.memory_space<vmem>>, vector<1x8x32xf32>
    %38 = vector.shape_cast %37 : vector<1x8x32xf32> to vector<8x32xf32>
    %39 = vector.shape_cast %36 : vector<8x32xf32> to vector<1x8x32xf32>
    tpu.vector_store %arg10[%c0_23, %c0_24, %c0_25], %39 {strides = array<i32>} : memref<2x8x32xf32, #tpu.memory_space<vmem>>, vector<1x8x32xf32>,
    %c0_26 = arith.constant 0 : index
    %c0_27 = arith.constant 0 : index
    %c0_28 = arith.constant 0 : index
    %40 = vector.load %arg8[%c0_26, %c0_27, %c0_28] : memref<2x8x1xf32, #tpu.memory_space<vmem>>, vector<1x8x1xf32>
    %41 = vector.shape_cast %40 : vector<1x8x1xf32> to vector<8x1xf32>
    %42 = vector.shape_cast %16 : vector<8x1xf32> to vector<1x8x1xf32>
    tpu.vector_store %arg8[%c0_26, %c0_27, %c0_28], %42 {strides = array<i32>} : memref<2x8x1xf32, #tpu.memory_space<vmem>>, vector<1x8x1xf32>,
    %43 = vector.extract_strided_slice %3 {offsets = [0, 32], sizes = [8, 32], strides = [1, 1]} : vector<8x64xf32> to vector<8x32xf32>
    %44 = vector.extract_strided_slice %5 {offsets = [0, 32], sizes = [8, 32], strides = [1, 1]} : vector<8x64xf32> to vector<8x32xf32>
    %45 = vector.extract_strided_slice %7 {offsets = [0, 32], sizes = [8, 32], strides = [1, 1]} : vector<8x64xf32> to vector<8x32xf32>
    %cst_29 = arith.constant dense<0.000000e+00> : vector<8x8xf32>
    %46 = tpu.matmul %43, %44, %cst_29 {dimension_numbers = #tpu.dot_dimension_numbers<[1], [1], [0], [0], [0, 0, 1, 0], [], []>} : vector<8x32xf32>, vector<8x32xf32>, vector<8x8xf32> -> vector<8x8xf32>
    %c1 = arith.constant 1 : index
    %c0_30 = arith.constant 0 : index
    %c0_31 = arith.constant 0 : index
    %47 = vector.load %arg8[%c1, %c0_30, %c0_31] : memref<2x8x1xf32, #tpu.memory_space<vmem>>, vector<1x8x1xf32>
    %48 = vector.shape_cast %47 : vector<1x8x1xf32> to vector<8x1xf32>
    %cst_32 = arith.constant dense<0xFF800000> : vector<8xf32>
    %49 = vector.multi_reduction <maximumf>, %46, %cst_32 [1] : vector<8x8xf32> to vector<8xf32>
    %50 = vector.shape_cast %49 : vector<8xf32> to vector<8x1xf32>
    %51 = arith.maximumf %48, %50 : vector<8x1xf32>
    %52 = arith.subf %48, %51 : vector<8x1xf32>
    %53 = math.exp %52 : vector<8x1xf32>
    %54 = vector.broadcast %51 : vector<8x1xf32> to vector<8x8xf32>
    %55 = arith.subf %46, %54 : vector<8x8xf32>
    %56 = math.exp %55 : vector<8x8xf32>
    %c1_33 = arith.constant 1 : index
    %c0_34 = arith.constant 0 : index
    %c0_35 = arith.constant 0 : index
    %57 = vector.load %arg9[%c1_33, %c0_34, %c0_35] : memref<2x8x1xf32, #tpu.memory_space<vmem>>, vector<1x8x1xf32>
    %58 = vector.shape_cast %57 : vector<1x8x1xf32> to vector<8x1xf32>
    %59 = arith.mulf %53, %58 : vector<8x1xf32>
    %cst_36 = arith.constant dense<0.000000e+00> : vector<8xf32>
    %60 = vector.multi_reduction <add>, %56, %cst_36 [1] : vector<8x8xf32> to vector<8xf32>
    %61 = vector.shape_cast %60 : vector<8xf32> to vector<8x1xf32>
    %62 = arith.addf %59, %61 : vector<8x1xf32>
    %c1_37 = arith.constant 1 : index
    %c0_38 = arith.constant 0 : index
    %c0_39 = arith.constant 0 : index
    %63 = vector.load %arg9[%c1_37, %c0_38, %c0_39] : memref<2x8x1xf32, #tpu.memory_space<vmem>>, vector<1x8x1xf32>
    %64 = vector.shape_cast %63 : vector<1x8x1xf32> to vector<8x1xf32>
    %65 = vector.shape_cast %62 : vector<8x1xf32> to vector<1x8x1xf32>
    tpu.vector_store %arg9[%c1_37, %c0_38, %c0_39], %65 {strides = array<i32>} : memref<2x8x1xf32, #tpu.memory_space<vmem>>, vector<1x8x1xf32>,
    %c1_40 = arith.constant 1 : index
    %c0_41 = arith.constant 0 : index
    %c0_42 = arith.constant 0 : index
    %66 = vector.load %arg10[%c1_40, %c0_41, %c0_42] : memref<2x8x32xf32, #tpu.memory_space<vmem>>, vector<1x8x32xf32>
    %67 = vector.shape_cast %66 : vector<1x8x32xf32> to vector<8x32xf32>
    %68 = vector.broadcast %53 : vector<8x1xf32> to vector<8x32xf32>
    %69 = arith.mulf %68, %67 : vector<8x32xf32>
    %cst_43 = arith.constant dense<0.000000e+00> : vector<8x32xf32>
    %70 = tpu.matmul %56, %45, %cst_43 {dimension_numbers = #tpu.dot_dimension_numbers<[1], [0], [0], [1], [0, 0, 1, 1], [], []>} : vector<8x8xf32>, vector<8x32xf32>, vector<8x32xf32> -> vector<8x32xf32>
    %71 = arith.addf %69, %70 : vector<8x32xf32>
    %c1_44 = arith.constant 1 : index
    %c0_45 = arith.constant 0 : index
    %c0_46 = arith.constant 0 : index
    %72 = vector.load %arg10[%c1_44, %c0_45, %c0_46] : memref<2x8x32xf32, #tpu.memory_space<vmem>>, vector<1x8x32xf32>
    %73 = vector.shape_cast %72 : vector<1x8x32xf32> to vector<8x32xf32>
    %74 = vector.shape_cast %71 : vector<8x32xf32> to vector<1x8x32xf32>
    tpu.vector_store %arg10[%c1_44, %c0_45, %c0_46], %74 {strides = array<i32>} : memref<2x8x32xf32, #tpu.memory_space<vmem>>, vector<1x8x32xf32>,
    %c1_47 = arith.constant 1 : index
    %c0_48 = arith.constant 0 : index
    %c0_49 = arith.constant 0 : index
    %75 = vector.load %arg8[%c1_47, %c0_48, %c0_49] : memref<2x8x1xf32, #tpu.memory_space<vmem>>, vector<1x8x1xf32>
    %76 = vector.shape_cast %75 : vector<1x8x1xf32> to vector<8x1xf32>
    %77 = vector.shape_cast %51 : vector<8x1xf32> to vector<1x8x1xf32>
    tpu.vector_store %arg8[%c1_47, %c0_48, %c0_49], %77 {strides = array<i32>} : memref<2x8x1xf32, #tpu.memory_space<vmem>>, vector<1x8x1xf32>,
    %c0_i32_50 = arith.constant 0 : i32
    %78 = arith.cmpi eq, %arg2, %c0_i32_50 : i32
    %79 = arith.extui %78 : i1 to i32
    %c0_i32_51 = arith.constant 0 : i32
    %80 = arith.cmpi ne, %79, %c0_i32_51 : i32
    scf.if %80 {
      %c0_52 = arith.constant 0 : index
      %c0_53 = arith.constant 0 : index
      %c0_54 = arith.constant 0 : index
      %81 = vector.load %arg9[%c0_52, %c0_53, %c0_54] : memref<2x8x1xf32, #tpu.memory_space<vmem>>, vector<1x8x1xf32>
      %82 = vector.shape_cast %81 : vector<1x8x1xf32> to vector<8x1xf32>
      %83 = tpu.reciprocal %82 {approx = true} : vector<8x1xf32> -> vector<8x1xf32>
      %c0_55 = arith.constant 0 : index
      %c0_56 = arith.constant 0 : index
      %c0_57 = arith.constant 0 : index
      %84 = vector.load %arg10[%c0_55, %c0_56, %c0_57] : memref<2x8x32xf32, #tpu.memory_space<vmem>>, vector<1x8x32xf32>
      %85 = vector.shape_cast %84 : vector<1x8x32xf32> to vector<8x32xf32>
      %86 = vector.broadcast %83 : vector<8x1xf32> to vector<8x32xf32>
      %87 = arith.mulf %85, %86 : vector<8x32xf32>
      %c1_58 = arith.constant 1 : index
      %c0_59 = arith.constant 0 : index
      %c0_60 = arith.constant 0 : index
      %88 = vector.load %arg9[%c1_58, %c0_59, %c0_60] : memref<2x8x1xf32, #tpu.memory_space<vmem>>, vector<1x8x1xf32>
      %89 = vector.shape_cast %88 : vector<1x8x1xf32> to vector<8x1xf32>
      %90 = tpu.reciprocal %89 {approx = true} : vector<8x1xf32> -> vector<8x1xf32>
      %c1_61 = arith.constant 1 : index
      %c0_62 = arith.constant 0 : index
      %c0_63 = arith.constant 0 : index
      %91 = vector.load %arg10[%c1_61, %c0_62, %c0_63] : memref<2x8x32xf32, #tpu.memory_space<vmem>>, vector<1x8x32xf32>
      %92 = vector.shape_cast %91 : vector<1x8x32xf32> to vector<8x32xf32>
      %93 = vector.broadcast %90 : vector<8x1xf32> to vector<8x32xf32>
      %94 = arith.mulf %92, %93 : vector<8x32xf32>
      %95 = tpu.concatenate %87, %94 in 1 : vector<8x32xf32>, vector<8x32xf32> -> vector<8x64xf32>
      %c0_64 = arith.constant 0 : index
      %c0_65 = arith.constant 0 : index
      %c0_66 = arith.constant 0 : index
      %96 = vector.load %arg6[%c0_64, %c0_65, %c0_66] : memref<1x8x64xf32, #tpu.memory_space<vmem>>, vector<1x8x64xf32>
      %97 = vector.shape_cast %96 : vector<1x8x64xf32> to vector<8x64xf32>
      %98 = vector.shape_cast %95 : vector<8x64xf32> to vector<1x8x64xf32>
      tpu.vector_store %arg6[%c0_64, %c0_65, %c0_66], %98 {strides = array<i32>} : memref<1x8x64xf32, #tpu.memory_space<vmem>>, vector<1x8x64xf32>,
    } else {
    }
    return
  }
  func.func @transform_0(%arg0: i32, %arg1: i32, %arg2: i32) -> (i32, i32, i32) {
    %c0_i32 = arith.constant 0 : i32
    %c0_i32_0 = arith.constant 0 : i32
    return %arg0, %arg1, %c0_i32 : i32, i32, i32
  }
  func.func @transform_1(%arg0: i32, %arg1: i32, %arg2: i32) -> (i32, i32, i32) {
    %c0_i32 = arith.constant 0 : i32
    %c0_i32_0 = arith.constant 0 : i32
    return %arg0, %arg2, %c0_i32 : i32, i32, i32
  }
  func.func @transform_2(%arg0: i32, %arg1: i32, %arg2: i32) -> (i32, i32, i32) {
    %c0_i32 = arith.constant 0 : i32
    %c0_i32_0 = arith.constant 0 : i32
    return %arg0, %arg2, %c0_i32 : i32, i32, i32
  }
  func.func @transform_3(%arg0: i32, %arg1: i32, %arg2: i32) -> (i32, i32, i32) {
    %c0_i32 = arith.constant 0 : i32
    %c0_i32_0 = arith.constant 0 : i32
    return %arg0, %arg1, %c0_i32 : i32, i32, i32
  }
}

</mosaic_0001>

<llo_original>
// kernel: tpu_custom_call.1
$region0: #{tpu_custom_call.1}
  #allocation0 [shape = 'u32[]', space=smem, size = 0x4, offset = 0x4, fixed_abs, tag = 'smem constant byte address 0x4 - core index']
  #allocation1 [shape = 'u32[144,128]{1,0:T(1,128)}', space=vmem, size = 0x12000, scoped, tag = 'internal scratch']
  #allocation2 [shape = 'f32[8,64]{1,0:T(8,128)}', space=vmem, size = 0x1000, scoped, tag = 'scratch operand']
  #allocation3 [shape = 'f32[2,8,1]{2,1,0:T(8,128)}', space=vmem, size = 0x2000, scoped, tag = 'scratch operand']
  #allocation4 [shape = 'f32[2,8,1]{2,1,0:T(8,128)}', space=vmem, size = 0x2000, scoped, tag = 'scratch operand']
  #allocation5 [shape = 'f32[2,8,32]{2,1,0:T(8,128)}', space=vmem, size = 0x2000, scoped, tag = 'scratch operand']
  %s0 = inlined_call_operand.hbm [shape: f32[2,8,64], index: 0, kind: input, shape index: {}]
  %s1 = inlined_call_operand.hbm [shape: f32[2,8,64], index: 1, kind: input, shape index: {}]
  %s2 = inlined_call_operand.hbm [shape: f32[2,8,64], index: 2, kind: input, shape index: {}]
  %s3 = inlined_call_operand.hbm [shape: f32[2,8,64], index: 3, kind: output, shape index: {}]
  %s4 = sld [smem:[#allocation0]]
  $region65: #{tpu_custom_call.1} parent=0
    _
  %s6 = ssub.s32 1, %s4
  %s7 = scalar_select 0, %s6, %s4
  $region1: #{tpu_custom_call.1} parent=0
    #allocation6 [shape = 'u8[8192]{0}', space=vmem, size = 0x2000, scoped, tag = 'input window, operand 0']
    #allocation7 [shape = 's32[2]{0}', space=sflag, size = 0x8, scoped, tag = 'scoped memory for tpu_custom_call.1']
    #allocation8 [shape = 's32[2]{0}', space=sflag, size = 0x8, scoped, tag = 'scoped memory for tpu_custom_call.1']
    #allocation9 [shape = 'u8[8192]{0}', space=vmem, size = 0x2000, scoped, tag = 'input window, operand 1']
    #allocation10 [shape = 's32[2]{0}', space=sflag, size = 0x8, scoped, tag = 'scoped memory for tpu_custom_call.1']
    #allocation11 [shape = 'u8[8192]{0}', space=vmem, size = 0x2000, scoped, tag = 'input window, operand 2']
    #allocation12 [shape = 'u8[8192]{0}', space=vmem, size = 0x2000, scoped, tag = 'output window, operand 0']
    %8 = vsyncpa [#allocation7], 0
    %s9 = scalar_lea.sflag [#allocation7], 1
    %10 = vsyncpa %s9, 0
    %11 = vsyncpa [#allocation10], 0
    %s12 = scalar_lea.sflag [#allocation10], 1
    %13 = vsyncpa %s12, 0
    %14 = vsyncpa [#allocation8], 0
    %s15 = scalar_lea.sflag [#allocation8], 1
    %16 = vsyncpa %s15, 0
    loop: start=0, step=1, limit=4
    $region2: #{tpu_custom_call.1} parent=1 // loop_pre_header
      _
    $region3: #{tpu_custom_call.1} parent=1 // loop_header
      %s18 = sphi 0, %s22
      %p19 = scmp.ge.s32.totalorder %s18, 4
      %s25 = sphi 0, %s44
      %s26 = sphi 0, %s40
      %s27 = sphi 0, %s36
      %s28 = sphi 0, %s25
      %s29 = sphi 0, %s26
      %s30 = sphi 0, %s27
      %s31 = sphi 0, %s28
      %s32 = sphi 0, %s29
      %s33 = sphi 0, %s30
      %s49 = sphi 0, %s51
      %s52 = sphi 0, %s49
      %s53 = sphi 0, %s52
      %s69 = sphi 0, %s53
      %s77 = sphi 0, %s79
      %s80 = sphi 0, %s77
      %s81 = sphi 0, %s80
      %s97 = sphi 0, %s81
      %s105 = sphi 0, %s107
      %s108 = sphi 0, %s105
      %s109 = sphi 0, %s108
      %s125 = sphi 0, %s109
      %s133 = sphi 0, %s135
      %s136 = sphi 0, %s133
      %s137 = sphi 0, %s136
      %s153 = sphi 0, %s137
    $region4: #{tpu_custom_call.1} parent=1 // loop_header_branch
      %21 = sbr.rel (%p19) target = $region8
    $region5: #{tpu_custom_call.1} parent=1 // loop_body
      %s23 = ssub.s32 %s18, 1
      %s24 = ssub.s32 %s18, 2
      %s34 = sadd.s32 1, %s27
      %p35 = scmp.ge.s32.totalorder %s34, 1
      %s36 = scalar_select %p35, 0, %s34
      %s37 = sadd.s32 1, %s26
      %s38 = scalar_select %p35, %s37, %s26
      %p39 = scmp.ge.s32.totalorder %s38, 1
      %s40 = scalar_select %p39, 0, %s38
      %s41 = sadd.s32 1, %s25
      %s42 = scalar_select %p39, %s41, %s25
      %p43 = scmp.ge.s32.totalorder %s42, 2
      %s44 = scalar_select %p43, 0, %s42
      %s45 = ssub.s32 %s25, %s44
      %s46 = ssub.s32 %s26, %s40
      %s47 = sor.u32 %s45, %s46
      %p48 = scmp.eq.s32.totalorder %s47, 0
      %s50 = sadd.s32 %s49, 1
      %s51 = scalar_select %p48, %s49, %s50
      %p54 = pneg %p48
      %p55 = scmp.eq.s32.totalorder %s18, 1
      %p56 = por %p54, %p55
      %p57 = scmp.ne.s32.totalorder %s49, %s52
      %p58 = scmp.eq.s32.totalorder %s18, 0
      %p59 = por %p57, %p58
      %p60 = scmp.ne.s32.totalorder %s49, %s52
      %p61 = scmp.eq.s32.totalorder %s23, 1
      %p62 = por %p60, %p61
      %p63 = scmp.ne.s32.totalorder %s52, %s53
      %p64 = scmp.eq.s32.totalorder %s23, 0
      %p65 = por %p63, %p64
      %p66 = scmp.ne.s32.totalorder %s52, %s53
      %p67 = scmp.eq.s32.totalorder %s24, 1
      %p68 = por %p66, %p67
      %p70 = scmp.ne.s32.totalorder %s53, %s69
      %p71 = scmp.eq.s32.totalorder %s24, 0
      %p72 = por %p70, %p71
      %s73 = ssub.s32 %s25, %s44
      %s74 = ssub.s32 %s27, %s36
      %s75 = sor.u32 %s73, %s74
      %p76 = scmp.eq.s32.totalorder %s75, 0
      %s78 = sadd.s32 %s77, 1
      %s79 = scalar_select %p76, %s77, %s78
      %p82 = pneg %p76
      %p83 = scmp.eq.s32.totalorder %s18, 1
      %p84 = por %p82, %p83
      %p85 = scmp.ne.s32.totalorder %s77, %s80
      %p86 = scmp.eq.s32.totalorder %s18, 0
      %p87 = por %p85, %p86
      %p88 = scmp.ne.s32.totalorder %s77, %s80
      %p89 = scmp.eq.s32.totalorder %s23, 1
      %p90 = por %p88, %p89
      %p91 = scmp.ne.s32.totalorder %s80, %s81
      %p92 = scmp.eq.s32.totalorder %s23, 0
      %p93 = por %p91, %p92
      %p94 = scmp.ne.s32.totalorder %s80, %s81
      %p95 = scmp.eq.s32.totalorder %s24, 1
      %p96 = por %p94, %p95
      %p98 = scmp.ne.s32.totalorder %s81, %s97
      %p99 = scmp.eq.s32.totalorder %s24, 0
      %p100 = por %p98, %p99
      %s101 = ssub.s32 %s25, %s44
      %s102 = ssub.s32 %s27, %s36
      %s103 = sor.u32 %s101, %s102
      %p104 = scmp.eq.s32.totalorder %s103, 0
      %s106 = sadd.s32 %s105, 1
      %s107 = scalar_select %p104, %s105, %s106
      %p110 = pneg %p104
      %p111 = scmp.eq.s32.totalorder %s18, 1
      %p112 = por %p110, %p111
      %p113 = scmp.ne.s32.totalorder %s105, %s108
      %p114 = scmp.eq.s32.totalorder %s18, 0
      %p115 = por %p113, %p114
      %p116 = scmp.ne.s32.totalorder %s105, %s108
      %p117 = scmp.eq.s32.totalorder %s23, 1
      %p118 = por %p116, %p117
      %p119 = scmp.ne.s32.totalorder %s108, %s109
      %p120 = scmp.eq.s32.totalorder %s23, 0
      %p121 = por %p119, %p120
      %p122 = scmp.ne.s32.totalorder %s108, %s109
      %p123 = scmp.eq.s32.totalorder %s24, 1
      %p124 = por %p122, %p123
      %p126 = scmp.ne.s32.totalorder %s109, %s125
      %p127 = scmp.eq.s32.totalorder %s24, 0
      %p128 = por %p126, %p127
      %s129 = ssub.s32 %s25, %s44
      %s130 = ssub.s32 %s26, %s40
      %s131 = sor.u32 %s129, %s130
      %p132 = scmp.eq.s32.totalorder %s131, 0
      %s134 = sadd.s32 %s133, 1
      %s135 = scalar_select %p132, %s133, %s134
      %p138 = pneg %p132
      %p139 = scmp.eq.s32.totalorder %s18, 1
      %p140 = por %p138, %p139
      %p141 = scmp.ne.s32.totalorder %s133, %s136
      %p142 = scmp.eq.s32.totalorder %s18, 0
      %p143 = por %p141, %p142
      %p144 = scmp.ne.s32.totalorder %s133, %s136
      %p145 = scmp.eq.s32.totalorder %s23, 1
      %p146 = por %p144, %p145
      %p147 = scmp.ne.s32.totalorder %s136, %s137
      %p148 = scmp.eq.s32.totalorder %s23, 0
      %p149 = por %p147, %p148
      %p150 = scmp.ne.s32.totalorder %s136, %s137
      %p151 = scmp.eq.s32.totalorder %s24, 1
      %p152 = por %p150, %p151
      %p154 = scmp.ne.s32.totalorder %s137, %s153
      %p155 = scmp.eq.s32.totalorder %s24, 0
      %p156 = por %p154, %p155
      %p157 = scmp.le.s32.totalorder 1, %s18
      %p158 = scmp.lt.s32.totalorder %s18, 3
      %p159 = pnand %p157, %p158
      %p160 = pneg %p159
      // Predicated region
      $region9: #{tpu_custom_call.1} parent=5 // pred_check
        _
      $region10: #{tpu_custom_call.1} parent=5 // pred_check_branch
        %162 = sbr.rel (%p159) target = $region12
      $region11: #{tpu_custom_call.1} parent=5 // pred_region
        %s163 = ssub.s32 %s18, 1
      $region12: #{tpu_custom_call.1} parent=5 // pred_fallthru
        _
      %p164 = scmp.lt.s32.totalorder %s18, 2
      // Predicated region
      $region13: #{tpu_custom_call.1} parent=5 // pred_check
        %p165 = pneg %p164
      $region14: #{tpu_custom_call.1} parent=5 // pred_check_branch
        %167 = sbr.rel (%p165) target = $region16
      $region15: #{tpu_custom_call.1} parent=5 // pred_region
        // Predicated region
        $region17: #{tpu_custom_call.1} parent=15 // pred_check
          %p168 = pneg %p59
        $region18: #{tpu_custom_call.1} parent=15 // pred_check_branch
          %170 = sbr.rel (%p168) target = $region20
        $region19: #{tpu_custom_call.1} parent=15 // pred_region
          %s171 = sand.u32 %s49, 1
          %s172 = scalar_lea.sflag [#allocation7], %s171
          %s173 = sand.u32 %s49, 1
          %s174 = smul.addr %s173, 8
          %s175 = scalar_lea.vmem [#allocation6], %s174
          %s177 = ssub.s32 128, 128
          %178 = vsyncadd %s172, %s177
          %s179 = sadd.s32 %s26, %s25
          %s180 = smul.addr %s179, 128
          %s181 = scalar_lea.hbm %s0, %s180
          %s183 = sshll.u32 %s175, 4
          %s184 = int_to_ptr.vmem [resolvable:$true] %s183
          %186 = dma.hbm_to_vmem [thread:$0]  %s181, 128, %s184, %s172
        $region20: #{tpu_custom_call.1} parent=15 // pred_fallthru
          _
        // Predicated region
        $region21: #{tpu_custom_call.1} parent=15 // pred_check
          %p187 = pneg %p87
        $region22: #{tpu_custom_call.1} parent=15 // pred_check_branch
          %189 = sbr.rel (%p187) target = $region24
        $region23: #{tpu_custom_call.1} parent=15 // pred_region
          %s190 = sand.u32 %s18, 1
          %s191 = scalar_lea.sflag [#allocation10], %s190
          %s192 = sand.u32 %s77, 1
          %s193 = smul.addr %s192, 8
          %s194 = scalar_lea.vmem [#allocation9], %s193
          %s196 = ssub.s32 128, 128
          %197 = vsyncadd %s191, %s196
          %s198 = sadd.s32 %s27, %s25
          %s199 = smul.addr %s198, 128
          %s200 = scalar_lea.hbm %s1, %s199
          %s202 = sshll.u32 %s194, 4
          %s203 = int_to_ptr.vmem [resolvable:$true] %s202
          %205 = dma.hbm_to_vmem [thread:$0]  %s200, 128, %s203, %s191
        $region24: #{tpu_custom_call.1} parent=15 // pred_fallthru
          _
        // Predicated region
        $region25: #{tpu_custom_call.1} parent=15 // pred_check
          %p206 = pneg %p115
        $region26: #{tpu_custom_call.1} parent=15 // pred_check_branch
          %208 = sbr.rel (%p206) target = $region28
        $region27: #{tpu_custom_call.1} parent=15 // pred_region
          %s209 = sand.u32 %s18, 1
          %s210 = scalar_lea.sflag [#allocation10], %s209
          %s211 = sand.u32 %s105, 1
          %s212 = smul.addr %s211, 8
          %s213 = scalar_lea.vmem [#allocation11], %s212
          %s215 = ssub.s32 128, 128
          %216 = vsyncadd %s210, %s215
          %s217 = sadd.s32 %s27, %s25
          %s218 = smul.addr %s217, 128
          %s219 = scalar_lea.hbm %s2, %s218
          %s221 = sshll.u32 %s213, 4
          %s222 = int_to_ptr.vmem [resolvable:$true] %s221
          %224 = dma.hbm_to_vmem [thread:$0]  %s219, 128, %s222, %s210
        $region28: #{tpu_custom_call.1} parent=15 // pred_fallthru
          _
      $region16: #{tpu_custom_call.1} parent=5 // pred_fallthru
        _
      %p225 = scmp.le.s32.totalorder 1, %s18
      %p226 = scmp.lt.s32.totalorder %s18, 3
      %p227 = pnand %p225, %p226
      %p228 = pneg %p227
      // Predicated region
      $region29: #{tpu_custom_call.1} parent=5 // pred_check
        _
      $region30: #{tpu_custom_call.1} parent=5 // pred_check_branch
        %230 = sbr.rel (%p227) target = $region32
      $region31: #{tpu_custom_call.1} parent=5 // pred_region
        %s231 = ssub.s32 %s18, 1
        %s232 = sand.u32 %s52, 1
        %s233 = scalar_lea.sflag [#allocation7], %s232
        %s234 = sand.u32 %s52, 1
        %s235 = smul.addr %s234, 8
        %s236 = scalar_lea.vmem [#allocation6], %s235
        // Predicated region
        $region33: #{tpu_custom_call.1} parent=31 // pred_check
          %p237 = pneg %p65
        $region34: #{tpu_custom_call.1} parent=31 // pred_check_branch
          %239 = sbr.rel (%p237) target = $region36
        $region35: #{tpu_custom_call.1} parent=31 // pred_region
          %240 = dma.done %s233, 128
        $region36: #{tpu_custom_call.1} parent=31 // pred_fallthru
          _
        %s241 = sand.u32 %s23, 1
        %s242 = scalar_lea.sflag [#allocation10], %s241
        %s243 = sand.u32 %s80, 1
        %s244 = smul.addr %s243, 8
        %s245 = scalar_lea.vmem [#allocation9], %s244
        // Predicated region
        $region37: #{tpu_custom_call.1} parent=31 // pred_check
          %p246 = pneg %p93
        $region38: #{tpu_custom_call.1} parent=31 // pred_check_branch
          %248 = sbr.rel (%p246) target = $region40
        $region39: #{tpu_custom_call.1} parent=31 // pred_region
          %249 = dma.done %s242, 128
        $region40: #{tpu_custom_call.1} parent=31 // pred_fallthru
          _
        %s250 = sand.u32 %s23, 1
        %s251 = scalar_lea.sflag [#allocation10], %s250
        %s252 = sand.u32 %s108, 1
        %s253 = smul.addr %s252, 8
        %s254 = scalar_lea.vmem [#allocation11], %s253
        // Predicated region
        $region41: #{tpu_custom_call.1} parent=31 // pred_check
          %p255 = pneg %p121
        $region42: #{tpu_custom_call.1} parent=31 // pred_check_branch
          %257 = sbr.rel (%p255) target = $region44
        $region43: #{tpu_custom_call.1} parent=31 // pred_region
          %258 = dma.done %s251, 128
        $region44: #{tpu_custom_call.1} parent=31 // pred_fallthru
          _
        %s259 = sand.u32 %s52, 1
        %s260 = scalar_lea.sflag [#allocation7], %s259
        %s261 = sand.u32 %s52, 1
        %s262 = smul.addr %s261, 8
        %s263 = scalar_lea.vmem [#allocation6], %s262
        %p264 = pneg %p65
        %p265 = pneg %p62
        %s266 = sand.u32 %s23, 1
        %s267 = scalar_lea.sflag [#allocation10], %s266
        %s268 = sand.u32 %s80, 1
        %s269 = smul.addr %s268, 8
        %s270 = scalar_lea.vmem [#allocation9], %s269
        %p271 = pneg %p93
        %p272 = pneg %p90
        %s273 = sand.u32 %s23, 1
        %s274 = scalar_lea.sflag [#allocation10], %s273
        %s275 = sand.u32 %s108, 1
        %s276 = smul.addr %s275, 8
        %s277 = scalar_lea.vmem [#allocation11], %s276
        %p278 = pneg %p121
        %p279 = pneg %p118
        %p280 = pneg %p149
        %p281 = pneg %p146
        %s282 = sand.u32 %s136, 1
        %s283 = scalar_lea.sflag [#allocation8], %s282
        %s284 = sand.u32 %s136, 1
        %s285 = smul.addr %s284, 8
        %s286 = scalar_lea.vmem [#allocation12], %s285
        %p287 = scmp.eq.s32.totalorder %s30, 0
        // Predicated region
        $region45: #{tpu_custom_call.1} parent=31 // pred_check
          %p288 = pneg %p287
        $region46: #{tpu_custom_call.1} parent=31 // pred_check_branch
          %290 = sbr.rel (%p288) target = $region48
        $region47: #{tpu_custom_call.1} parent=31 // pred_region
          %vm291 = vcmask 7168
          %292 = vst.msk [vmem:[#allocation3] sm:$0xff] %vm291, -inf
          %293 = vst.msk [vmem:[#allocation3 + $0x8] sm:$0xff] %vm291, -inf
          %294 = vst.msk [vmem:[#allocation4] sm:$0xff] %vm291, 0.0
          %295 = vst.msk [vmem:[#allocation4 + $0x8] sm:$0xff] %vm291, 0.0
          %vm296 = vcmask 261120
          %297 = vst.msk [vmem:[#allocation5] sm:$0xff] %vm296, 0.0
          %298 = vst.msk [vmem:[#allocation5 + $0x8] sm:$0xff] %vm296, 0.0
          %v299 = vld [vmem:[%s236] sm:$0xff]
          %v300 = vmul.f32 %v299, 0.17677669
          %vm301 = vcmask 523264
          %302 = vst.msk [vmem:[#allocation2] sm:$0xff] %vm301, %v300
        $region48: #{tpu_custom_call.1} parent=31 // pred_fallthru
          _
        %v303 = vld [vmem:[#allocation2] sm:$0xff]
        %v304 = vld [vmem:[%s245] sm:$0xff]
        %v305 = vld [vmem:[%s254] sm:$0xff]
        %vm306 = vcmask 261120
        %v308 = vsel %vm306, %v303, 0
        %v311 = vsel %vm306, %v304, 0
        %313 = vmatprep.subr.mxu0 0.0
        %314 = vmatpush1.xpose.msra.mxu0 %v311
        %315 = vmatprep.subr.mxu0 0.0
        %316 = vmatpush1.xpose.msra.mxu0 0.0
        %317 = vmatprep.subr.mxu0 0.0
        %318 = vmatpush1.xpose.msra.mxu0 0.0
        %319 = vmatprep.subr.mxu0 0.0
        %320 = vmatpush1.xpose.msra.mxu0 0.0
        %321 = vmatprep.subr.mxu0 0.0
        %322 = vmatpush1.xpose.msra.mxu0 0.0
        %323 = vmatprep.subr.mxu0 0.0
        %324 = vmatpush1.xpose.msra.mxu0 0.0
        %325 = vmatprep.subr.mxu0 0.0
        %326 = vmatpush1.xpose.msra.mxu0 0.0
        %327 = vmatprep.subr.mxu0 0.0
        %328 = vmatpush1.xpose.msra.mxu0 0.0
        %329 = vmatprep.subr.mxu0 0.0
        %330 = vmatpush1.xpose.msra.mxu0 0.0
        %331 = vmatprep.subr.mxu0 0.0
        %332 = vmatpush1.xpose.msra.mxu0 0.0
        %333 = vmatprep.subr.mxu0 0.0
        %334 = vmatpush1.xpose.msra.mxu0 0.0
        %335 = vmatprep.subr.mxu0 0.0
        %336 = vmatpush1.xpose.msra.mxu0 0.0
        %337 = vmatprep.subr.mxu0 0.0
        %338 = vmatpush1.xpose.msra.mxu0 0.0
        %339 = vmatprep.subr.mxu0 0.0
        %340 = vmatpush1.xpose.msra.mxu0 0.0
        %341 = vmatprep.subr.mxu0 0.0
        %342 = vmatpush1.xpose.msra.mxu0 0.0
        %343 = vmatprep.subr.mxu0 0.0
        %344 = vmatpush1.xpose.msra.mxu0 0.0
        %345 = vmatprep.subr.mxu0 0.0
        %346 = vmatpush1.xpose.msra.mxu0 0.0
        %347 = vmatprep.subr.mxu0 0.0
        %348 = vmatpush1.xpose.msra.mxu0 0.0
        %349 = vmatprep.subr.mxu0 0.0
        %350 = vmatpush1.xpose.msra.mxu0 0.0
        %351 = vmatprep.subr.mxu0 0.0
        %352 = vmatpush1.xpose.msra.mxu0 0.0
        %353 = vmatprep.subr.mxu0 0.0
        %354 = vmatpush1.xpose.msra.mxu0 0.0
        %355 = vmatprep.subr.mxu0 0.0
        %356 = vmatpush1.xpose.msra.mxu0 0.0
        %357 = vmatprep.subr.mxu0 0.0
        %358 = vmatpush1.xpose.msra.mxu0 0.0
        %359 = vmatprep.subr.mxu0 0.0
        %360 = vmatpush1.xpose.msra.mxu0 0.0
        %361 = vmatprep.subr.mxu0 0.0
        %362 = vmatpush1.xpose.msra.mxu0 0.0
        %363 = vmatprep.subr.mxu0 0.0
        %364 = vmatpush1.xpose.msra.mxu0 0.0
        %365 = vmatprep.subr.mxu0 0.0
        %366 = vmatpush1.xpose.msra.mxu0 0.0
        %367 = vmatprep.subr.mxu0 0.0
        %368 = vmatpush1.xpose.msra.mxu0 0.0
        %369 = vmatprep.subr.mxu0 0.0
        %370 = vmatpush1.xpose.msra.mxu0 0.0
        %371 = vmatprep.subr.mxu0 0.0
        %372 = vmatpush1.xpose.msra.mxu0 0.0
        %373 = vmatprep.subr.mxu0 0.0
        %374 = vmatpush1.xpose.msra.mxu0 0.0
        %375 = vmatprep.subr.mxu0 0.0
        %376 = vmatpush1.xpose.msra.mxu0 0.0
        %377 = vmatprep.mubr.f32.mxu0 0.0
        %378 = vmatmul.mubr.f32.gmra.mrb[0].mxu0 %v308
        %v379 = vpop.f32.mrb[0].mxu0
        %v380 = vadd.f32 0.0, %v379
        %v381 = vpop.f32.mrb[0].mxu0
        %382 = vdwg.mxu0
        %v383 = vld [vmem:[#allocation3] sm:$0xff]
        %vm384 = vcmask 64512
        %v385 = vsel %vm384, %v380, -inf
        %386 = vmax.xlane.f32.xlu0 %v385
        %v387 = vpop.xlane.xlu0 %386
        %v388 = vmax.f32 %v383, %v387
        %v389 = vsub.f32 %v383, %v388
        %v390 = vmul.f32 %v389, 1.442695
        %v391 = vpow.pop %v390
        %393 = vset.pattern.permute.xlu0 0
        %394 = vperm.xlu0 %393, %v388
        %v395 = vpop.permute.xlu0 %394
        %v397 = vsub.f32 %v380, %v395
        %v398 = vmul.f32 %v397, 1.442695
        %v399 = vpow.pop %v398
        %v400 = vld [vmem:[#allocation4] sm:$0xff]
        %v401 = vmul.f32 %v391, %v400
        %v402 = vsel %vm384, %v399, 0.0
        %403 = vadd.xlane.f32.xlu0 %v402
        %v404 = vpop.xlane.xlu0 %403
        %v405 = vadd.f32 %v401, %v404
        %vm406 = vcmask 7168
        %407 = vst.msk [vmem:[#allocation4] sm:$0xff] %vm406, %v405
        %v408 = vld [vmem:[#allocation5] sm:$0xff]
        %410 = vset.pattern.permute.xlu0 0
        %411 = vperm.xlu0 %410, %v391
        %v412 = vpop.permute.xlu0 %411
        %v414 = vmul.f32 %v412, %v408
        %v416 = vsel %vm384, %v399, 0
        %418 = vmatprep.subr.mxu0 0.0
        %419 = vmatpush1.msra.mxu0 %v305
        %420 = vmatprep.subr.mxu0 0.0
        %421 = vmatpush1.msra.mxu0 0.0
        %422 = vmatprep.subr.mxu0 0.0
        %423 = vmatpush1.msra.mxu0 0.0
        %424 = vmatprep.subr.mxu0 0.0
        %425 = vmatpush1.msra.mxu0 0.0
        %426 = vmatprep.subr.mxu0 0.0
        %427 = vmatpush1.msra.mxu0 0.0
        %428 = vmatprep.subr.mxu0 0.0
        %429 = vmatpush1.msra.mxu0 0.0
        %430 = vmatprep.subr.mxu0 0.0
        %431 = vmatpush1.msra.mxu0 0.0
        %432 = vmatprep.subr.mxu0 0.0
        %433 = vmatpush1.msra.mxu0 0.0
        %434 = vmatprep.subr.mxu0 0.0
        %435 = vmatpush1.msra.mxu0 0.0
        %436 = vmatprep.subr.mxu0 0.0
        %437 = vmatpush1.msra.mxu0 0.0
        %438 = vmatprep.subr.mxu0 0.0
        %439 = vmatpush1.msra.mxu0 0.0
        %440 = vmatprep.subr.mxu0 0.0
        %441 = vmatpush1.msra.mxu0 0.0
        %442 = vmatprep.subr.mxu0 0.0
        %443 = vmatpush1.msra.mxu0 0.0
        %444 = vmatprep.subr.mxu0 0.0
        %445 = vmatpush1.msra.mxu0 0.0
        %446 = vmatprep.subr.mxu0 0.0
        %447 = vmatpush1.msra.mxu0 0.0
        %448 = vmatprep.subr.mxu0 0.0
        %449 = vmatpush1.msra.mxu0 0.0
        %450 = vmatprep.subr.mxu0 0.0
        %451 = vmatpush1.msra.mxu0 0.0
        %452 = vmatprep.subr.mxu0 0.0
        %453 = vmatpush1.msra.mxu0 0.0
        %454 = vmatprep.subr.mxu0 0.0
        %455 = vmatpush1.msra.mxu0 0.0
        %456 = vmatprep.subr.mxu0 0.0
        %457 = vmatpush1.msra.mxu0 0.0
        %458 = vmatprep.subr.mxu0 0.0
        %459 = vmatpush1.msra.mxu0 0.0
        %460 = vmatprep.subr.mxu0 0.0
        %461 = vmatpush1.msra.mxu0 0.0
        %462 = vmatprep.subr.mxu0 0.0
        %463 = vmatpush1.msra.mxu0 0.0
        %464 = vmatprep.subr.mxu0 0.0
        %465 = vmatpush1.msra.mxu0 0.0
        %466 = vmatprep.subr.mxu0 0.0
        %467 = vmatpush1.msra.mxu0 0.0
        %468 = vmatprep.subr.mxu0 0.0
        %469 = vmatpush1.msra.mxu0 0.0
        %470 = vmatprep.subr.mxu0 0.0
        %471 = vmatpush1.msra.mxu0 0.0
        %472 = vmatprep.subr.mxu0 0.0
        %473 = vmatpush1.msra.mxu0 0.0
        %474 = vmatprep.subr.mxu0 0.0
        %475 = vmatpush1.msra.mxu0 0.0
        %476 = vmatprep.subr.mxu0 0.0
        %477 = vmatpush1.msra.mxu0 0.0
        %478 = vmatprep.subr.mxu0 0.0
        %479 = vmatpush1.msra.mxu0 0.0
        %480 = vmatprep.subr.mxu0 0.0
        %481 = vmatpush1.msra.mxu0 0.0
        %482 = vmatprep.mubr.f32.mxu0 0.0
        %483 = vmatmul.mubr.f32.gmra.mrb[0].mxu0 %v416
        %v484 = vpop.f32.mrb[0].mxu0
        %v485 = vadd.f32 0.0, %v484
        %v486 = vpop.f32.mrb[0].mxu0
        %487 = vdwg.mxu0
        %v488 = vadd.f32 %v414, %v485
        %489 = vst.msk [vmem:[#allocation5] sm:$0xff] %vm306, %v488
        %490 = vst.msk [vmem:[#allocation3] sm:$0xff] %vm406, %v388
        %491 = vrot.lane.b32.xlu0 %v303, 96
        %v492 = vpop.permute.xlu0 %491
        %493 = vrot.lane.b32.xlu0 %v304, 96
        %v494 = vpop.permute.xlu0 %493
        %v495 = vsel %vm306, %v492, 0
        %v497 = vsel %vm306, %v494, 0
        %499 = vmatprep.subr.mxu0 0.0
        %500 = vmatpush1.xpose.msra.mxu0 %v497
        %501 = vmatprep.subr.mxu0 0.0
        %502 = vmatpush1.xpose.msra.mxu0 0.0
        %503 = vmatprep.subr.mxu0 0.0
        %504 = vmatpush1.xpose.msra.mxu0 0.0
        %505 = vmatprep.subr.mxu0 0.0
        %506 = vmatpush1.xpose.msra.mxu0 0.0
        %507 = vmatprep.subr.mxu0 0.0
        %508 = vmatpush1.xpose.msra.mxu0 0.0
        %509 = vmatprep.subr.mxu0 0.0
        %510 = vmatpush1.xpose.msra.mxu0 0.0
        %511 = vmatprep.subr.mxu0 0.0
        %512 = vmatpush1.xpose.msra.mxu0 0.0
        %513 = vmatprep.subr.mxu0 0.0
        %514 = vmatpush1.xpose.msra.mxu0 0.0
        %515 = vmatprep.subr.mxu0 0.0
        %516 = vmatpush1.xpose.msra.mxu0 0.0
        %517 = vmatprep.subr.mxu0 0.0
        %518 = vmatpush1.xpose.msra.mxu0 0.0
        %519 = vmatprep.subr.mxu0 0.0
        %520 = vmatpush1.xpose.msra.mxu0 0.0
        %521 = vmatprep.subr.mxu0 0.0
        %522 = vmatpush1.xpose.msra.mxu0 0.0
        %523 = vmatprep.subr.mxu0 0.0
        %524 = vmatpush1.xpose.msra.mxu0 0.0
        %525 = vmatprep.subr.mxu0 0.0
        %526 = vmatpush1.xpose.msra.mxu0 0.0
        %527 = vmatprep.subr.mxu0 0.0
        %528 = vmatpush1.xpose.msra.mxu0 0.0
        %529 = vmatprep.subr.mxu0 0.0
        %530 = vmatpush1.xpose.msra.mxu0 0.0
        %531 = vmatprep.subr.mxu0 0.0
        %532 = vmatpush1.xpose.msra.mxu0 0.0
        %533 = vmatprep.subr.mxu0 0.0
        %534 = vmatpush1.xpose.msra.mxu0 0.0
        %535 = vmatprep.subr.mxu0 0.0
        %536 = vmatpush1.xpose.msra.mxu0 0.0
        %537 = vmatprep.subr.mxu0 0.0
        %538 = vmatpush1.xpose.msra.mxu0 0.0
        %539 = vmatprep.subr.mxu0 0.0
        %540 = vmatpush1.xpose.msra.mxu0 0.0
        %541 = vmatprep.subr.mxu0 0.0
        %542 = vmatpush1.xpose.msra.mxu0 0.0
        %543 = vmatprep.subr.mxu0 0.0
        %544 = vmatpush1.xpose.msra.mxu0 0.0
        %545 = vmatprep.subr.mxu0 0.0
        %546 = vmatpush1.xpose.msra.mxu0 0.0
        %547 = vmatprep.subr.mxu0 0.0
        %548 = vmatpush1.xpose.msra.mxu0 0.0
        %549 = vmatprep.subr.mxu0 0.0
        %550 = vmatpush1.xpose.msra.mxu0 0.0
        %551 = vmatprep.subr.mxu0 0.0
        %552 = vmatpush1.xpose.msra.mxu0 0.0
        %553 = vmatprep.subr.mxu0 0.0
        %554 = vmatpush1.xpose.msra.mxu0 0.0
        %555 = vmatprep.subr.mxu0 0.0
        %556 = vmatpush1.xpose.msra.mxu0 0.0
        %557 = vmatprep.subr.mxu0 0.0
        %558 = vmatpush1.xpose.msra.mxu0 0.0
        %559 = vmatprep.subr.mxu0 0.0
        %560 = vmatpush1.xpose.msra.mxu0 0.0
        %561 = vmatprep.subr.mxu0 0.0
        %562 = vmatpush1.xpose.msra.mxu0 0.0
        %563 = vmatprep.mubr.f32.mxu0 0.0
        %564 = vmatmul.mubr.f32.gmra.mrb[0].mxu0 %v495
        %v565 = vpop.f32.mrb[0].mxu0
        %v566 = vadd.f32 0.0, %v565
        %v567 = vpop.f32.mrb[0].mxu0
        %568 = vdwg.mxu0
        %s569 = scalar_lea.vmem [#allocation3], 8
        %v570 = vld [vmem:[%s569] sm:$0xff]
        %v571 = vsel %vm384, %v566, -inf
        %572 = vmax.xlane.f32.xlu0 %v571
        %v573 = vpop.xlane.xlu0 %572
        %v574 = vmax.f32 %v570, %v573
        %v575 = vsub.f32 %v570, %v574
        %v576 = vmul.f32 %v575, 1.442695
        %v577 = vpow.pop %v576
        %579 = vset.pattern.permute.xlu0 0
        %580 = vperm.xlu0 %579, %v574
        %v581 = vpop.permute.xlu0 %580
        %v583 = vsub.f32 %v566, %v581
        %v584 = vmul.f32 %v583, 1.442695
        %v585 = vpow.pop %v584
        %s586 = scalar_lea.vmem [#allocation4], 8
        %v587 = vld [vmem:[%s586] sm:$0xff]
        %v588 = vmul.f32 %v577, %v587
        %v589 = vsel %vm384, %v585, 0.0
        %590 = vadd.xlane.f32.xlu0 %v589
        %v591 = vpop.xlane.xlu0 %590
        %v592 = vadd.f32 %v588, %v591
        %593 = vst.msk [vmem:[%s586] sm:$0xff] %vm406, %v592
        %s594 = scalar_lea.vmem [#allocation5], 8
        %v595 = vld [vmem:[%s594] sm:$0xff]
        %597 = vset.pattern.permute.xlu0 0
        %598 = vperm.xlu0 %597, %v577
        %v599 = vpop.permute.xlu0 %598
        %v601 = vmul.f32 %v599, %v595
        %603 = vrot.lane.b32.xlu0 %v305, 96
        %v604 = vpop.permute.xlu0 %603
        %v607 = vsel %vm384, %v585, 0
        %609 = vmatprep.subr.mxu0 0.0
        %610 = vmatpush1.msra.mxu0 %v604
        %611 = vmatprep.subr.mxu0 0.0
        %612 = vmatpush1.msra.mxu0 0.0
        %613 = vmatprep.subr.mxu0 0.0
        %614 = vmatpush1.msra.mxu0 0.0
        %615 = vmatprep.subr.mxu0 0.0
        %616 = vmatpush1.msra.mxu0 0.0
        %617 = vmatprep.subr.mxu0 0.0
        %618 = vmatpush1.msra.mxu0 0.0
        %619 = vmatprep.subr.mxu0 0.0
        %620 = vmatpush1.msra.mxu0 0.0
        %621 = vmatprep.subr.mxu0 0.0
        %622 = vmatpush1.msra.mxu0 0.0
        %623 = vmatprep.subr.mxu0 0.0
        %624 = vmatpush1.msra.mxu0 0.0
        %625 = vmatprep.subr.mxu0 0.0
        %626 = vmatpush1.msra.mxu0 0.0
        %627 = vmatprep.subr.mxu0 0.0
        %628 = vmatpush1.msra.mxu0 0.0
        %629 = vmatprep.subr.mxu0 0.0
        %630 = vmatpush1.msra.mxu0 0.0
        %631 = vmatprep.subr.mxu0 0.0
        %632 = vmatpush1.msra.mxu0 0.0
        %633 = vmatprep.subr.mxu0 0.0
        %634 = vmatpush1.msra.mxu0 0.0
        %635 = vmatprep.subr.mxu0 0.0
        %636 = vmatpush1.msra.mxu0 0.0
        %637 = vmatprep.subr.mxu0 0.0
        %638 = vmatpush1.msra.mxu0 0.0
        %639 = vmatprep.subr.mxu0 0.0
        %640 = vmatpush1.msra.mxu0 0.0
        %641 = vmatprep.subr.mxu0 0.0
        %642 = vmatpush1.msra.mxu0 0.0
        %643 = vmatprep.subr.mxu0 0.0
        %644 = vmatpush1.msra.mxu0 0.0
        %645 = vmatprep.subr.mxu0 0.0
        %646 = vmatpush1.msra.mxu0 0.0
        %647 = vmatprep.subr.mxu0 0.0
        %648 = vmatpush1.msra.mxu0 0.0
        %649 = vmatprep.subr.mxu0 0.0
        %650 = vmatpush1.msra.mxu0 0.0
        %651 = vmatprep.subr.mxu0 0.0
        %652 = vmatpush1.msra.mxu0 0.0
        %653 = vmatprep.subr.mxu0 0.0
        %654 = vmatpush1.msra.mxu0 0.0
        %655 = vmatprep.subr.mxu0 0.0
        %656 = vmatpush1.msra.mxu0 0.0
        %657 = vmatprep.subr.mxu0 0.0
        %658 = vmatpush1.msra.mxu0 0.0
        %659 = vmatprep.subr.mxu0 0.0
        %660 = vmatpush1.msra.mxu0 0.0
        %661 = vmatprep.subr.mxu0 0.0
        %662 = vmatpush1.msra.mxu0 0.0
        %663 = vmatprep.subr.mxu0 0.0
        %664 = vmatpush1.msra.mxu0 0.0
        %665 = vmatprep.subr.mxu0 0.0
        %666 = vmatpush1.msra.mxu0 0.0
        %667 = vmatprep.subr.mxu0 0.0
        %668 = vmatpush1.msra.mxu0 0.0
        %669 = vmatprep.subr.mxu0 0.0
        %670 = vmatpush1.msra.mxu0 0.0
        %671 = vmatprep.subr.mxu0 0.0
        %672 = vmatpush1.msra.mxu0 0.0
        %673 = vmatprep.mubr.f32.mxu0 0.0
        %674 = vmatmul.mubr.f32.gmra.mrb[0].mxu0 %v607
        %v675 = vpop.f32.mrb[0].mxu0
        %v676 = vadd.f32 0.0, %v675
        %v677 = vpop.f32.mrb[0].mxu0
        %678 = vdwg.mxu0
        %v679 = vadd.f32 %v601, %v676
        %680 = vst.msk [vmem:[%s594] sm:$0xff] %vm306, %v679
        %681 = vst.msk [vmem:[%s569] sm:$0xff] %vm406, %v574
        // Predicated region
        $region49: #{tpu_custom_call.1} parent=31 // pred_check
          %p682 = pneg %p287
        $region50: #{tpu_custom_call.1} parent=31 // pred_check_branch
          %684 = sbr.rel (%p682) target = $region52
        $region51: #{tpu_custom_call.1} parent=31 // pred_region
          %v685 = vld [vmem:[#allocation4] sm:$0xff]
          %v686 = vrcp.pop %v685
          %v687 = vld [vmem:[#allocation5] sm:$0xff]
          %689 = vset.pattern.permute.xlu0 0
          %690 = vperm.xlu0 %689, %v686
          %v691 = vpop.permute.xlu0 %690
          %v693 = vmul.f32 %v687, %v691
          %v694 = vld [vmem:[%s586] sm:$0xff]
          %v695 = vrcp.pop %v694
          %v696 = vld [vmem:[%s594] sm:$0xff]
          %698 = vset.pattern.permute.xlu0 0
          %699 = vperm.xlu0 %698, %v695
          %v700 = vpop.permute.xlu0 %699
          %v702 = vmul.f32 %v696, %v700
          %704 = vrot.lane.b32.xlu0 %v702, 32
          %v705 = vpop.permute.xlu0 %704
          %v707 = vsel %vm306, %v693, %v705
          %vm708 = vcmask 523264
          %709 = vst.msk [vmem:[%s286] sm:$0xff] %vm708, %v707
        $region52: #{tpu_custom_call.1} parent=31 // pred_fallthru
          _
        %s710 = sand.u32 %s136, 1
        %s711 = scalar_lea.sflag [#allocation8], %s710
        %s712 = sand.u32 %s136, 1
        %s713 = smul.addr %s712, 8
        %s714 = scalar_lea.vmem [#allocation12], %s713
        // Predicated region
        $region53: #{tpu_custom_call.1} parent=31 // pred_check
          %p715 = pneg %p146
        $region54: #{tpu_custom_call.1} parent=31 // pred_check_branch
          %717 = sbr.rel (%p715) target = $region56
        $region55: #{tpu_custom_call.1} parent=31 // pred_region
          %s719 = ssub.s32 128, 128
          %720 = vsyncadd %s711, %s719
          %s721 = sadd.s32 %s29, %s28
          %s722 = smul.addr %s721, 128
          %s723 = scalar_lea.hbm %s3, %s722
          %s725 = sshll.u32 %s714, 4
          %s726 = int_to_ptr.vmem [resolvable:$true] %s725
          %728 = dma.vmem_to_hbm [thread:$0]  %s726, 128, %s723, %s711
        $region56: #{tpu_custom_call.1} parent=31 // pred_fallthru
          _
      $region32: #{tpu_custom_call.1} parent=5 // pred_fallthru
        _
      %p729 = scmp.le.s32.totalorder 2, %s18
      // Predicated region
      $region57: #{tpu_custom_call.1} parent=5 // pred_check
        %p730 = pneg %p729
      $region58: #{tpu_custom_call.1} parent=5 // pred_check_branch
        %732 = sbr.rel (%p730) target = $region60
      $region59: #{tpu_custom_call.1} parent=5 // pred_region
        %s733 = ssub.s32 %s18, 2
        // Predicated region
        $region61: #{tpu_custom_call.1} parent=59 // pred_check
          %p734 = pneg %p152
        $region62: #{tpu_custom_call.1} parent=59 // pred_check_branch
          %736 = sbr.rel (%p734) target = $region64
        $region63: #{tpu_custom_call.1} parent=59 // pred_region
          %s737 = sand.u32 %s137, 1
          %s738 = scalar_lea.sflag [#allocation8], %s737
          %s739 = sand.u32 %s137, 1
          %s740 = smul.addr %s739, 8
          %s741 = scalar_lea.vmem [#allocation12], %s740
          %742 = dma.done %s738, 128
        $region64: #{tpu_custom_call.1} parent=59 // pred_fallthru
          _
      $region60: #{tpu_custom_call.1} parent=5 // pred_fallthru
        _
    $region6: #{tpu_custom_call.1} parent=1 // loop_footer
      %s22 = sadd.s32 1, %s18
    $region7: #{tpu_custom_call.1} parent=1 // loop_footer_branch
      %17 = sbr.rel target = $region3
    $region8: #{tpu_custom_call.1} parent=1 // loop_exit
      _
    %743 = vsyncpa [#allocation7], 1
    %s744 = scalar_lea.sflag [#allocation7], 1
    %745 = vsyncpa %s744, 1
    %746 = vsyncpa [#allocation10], 1
    %s747 = scalar_lea.sflag [#allocation10], 1
    %748 = vsyncpa %s747, 1
    %749 = vsyncpa [#allocation8], 1
    %s750 = scalar_lea.sflag [#allocation8], 1
    %751 = vsyncpa %s750, 1

</llo_original>
